<compile_context>
chip_gen: v6e
topology: v6e:2x2x1
jax: 0.10.0
libtpu: 0.0.40
codegen_flags: <defaults>
</compile_context>

<pallas_src>
import jax
import jax.numpy as jnp
from jax.experimental import pallas as pl
from jax.experimental.pallas import tpu as pltpu

_LANE = 128
_SUBLANE = 8
_NATURAL_LAYOUT_MIN_M = 32        # m >= this: operate on [B, n, m] directly
_SMALL_PROBLEM_BYTES = 2 << 20    # below this, fused XLA beats kernel-launch cost
_PARALLEL_SPLIT_BYTES = 1 << 20   # above this, force >= 2 grid tiles (megacore)


def _round_up(x: int, mult: int) -> int:
    return ((x + mult - 1) // mult) * mult


def _vmem_budget():
    """Return (per-block byte target, vmem_limit_bytes), sized per TPU generation."""
    block_target = 2 * 1024 * 1024      # safe on v7x (64 MiB physical VMEM)
    vmem_limit = 32 * 1024 * 1024
    try:
        cap = getattr(pltpu.get_tpu_info(), "vmem_capacity_bytes", None)
        if cap is not None and cap >= 100 * 1024 * 1024:
            block_target = 4 * 1024 * 1024   # v5e / v6e: 128 MiB physical VMEM
            vmem_limit = 64 * 1024 * 1024
    except Exception:
        pass  # conservative defaults if hardware info is unavailable
    return block_target, vmem_limit


def _log_standardize(y, axis):
    """Log() then Standardize() along `axis` (the observation axis); f32 math."""
    n = y.shape[axis]
    log_y = jnp.log(y.astype(jnp.float32))
    mean = jnp.mean(log_y, axis=axis, keepdims=True)
    diff = log_y - mean
    # torch.std default is unbiased (Bessel's correction, n-1 divisor).
    var = jnp.sum(diff * diff, axis=axis, keepdims=True) * jnp.float32(1.0 / (n - 1))
    std = jnp.sqrt(var)
    # BoTorch clamp on std itself: stdvs = stdvs.where(stdvs >= 1e-8, 1.0).
    # (1/std vs /std differs by <= 1 ulp; cheap -- std has the reduced shape.)
    inv_std = jnp.where(std >= jnp.float32(1e-8),
                        jnp.float32(1.0) / std,
                        jnp.float32(1.0))
    return diff * inv_std


# --------------------------- Pallas kernel bodies --------------------------- #

def _bnm_kernel(y_ref, out_ref):
    # (Bt, n, m) block of the original [B, n, m] array; reduce over sublane axis n.
    out_ref[...] = _log_standardize(y_ref[...], axis=1).astype(out_ref.dtype)


def _lane_dense_kernel(y_ref, out_ref):
    # (n, lane_tile) block of the lane-packed [n, B*m] view; columns independent.
    out_ref[...] = _log_standardize(y_ref[...], axis=0).astype(out_ref.dtype)


# ------------------------------ kernel drivers ------------------------------ #

def _run_natural(Y, block_target, vmem_limit, batch_tile=None):
    """m is lane-dense enough: tile the batch axis, zero wrapper repack."""
    B, n, m = Y.shape
    itemsize = jnp.dtype(Y.dtype).itemsize
    total_bytes = B * n * m * itemsize

    # VMEM blocks are (8,128)-tiled on the minor (n, m) dims and the compute
    # temporaries are f32, so size the batch tile by the padded f32 footprint.
    padded_batch_row = _round_up(n, _SUBLANE) * _round_up(m, _LANE) * 4
    if batch_tile is None:
        bt = max(1, block_target // padded_batch_row)
        bt = min(bt, B)
        if B >= 2 and total_bytes >= _PARALLEL_SPLIT_BYTES:
            bt = min(bt, pl.cdiv(B, 2))   # >= 2 grid tiles -> both v7x TCs busy
    else:
        bt = max(1, min(int(batch_tile), B))
    grid = (pl.cdiv(B, bt),)

    return pl.pallas_call(
        _bnm_kernel,
        out_shape=jax.ShapeDtypeStruct((B, n, m), Y.dtype),
        grid_spec=pltpu.PrefetchScalarGridSpec(
            num_scalar_prefetch=0,
            grid=grid,
            in_specs=[pl.BlockSpec((bt, n, m), lambda i: (i, 0, 0))],
            out_specs=pl.BlockSpec((bt, n, m), lambda i: (i, 0, 0)),
        ),
        compiler_params=pltpu.CompilerParams(
            dimension_semantics=("parallel",),
            vmem_limit_bytes=vmem_limit,
        ),
        cost_estimate=pl.CostEstimate(
            flops=int(6 * B * n * m),
            transcendentals=int(B * n * m + 2 * B * m),
            bytes_accessed=int(2 * B * n * m * itemsize),
        ),
    )(Y)


def _run_lane_dense(Y, block_target, vmem_limit, lane_tile=None):
    """Small m: pack the (batch, outcome) columns onto the 128-wide lane axis."""
    B, n, m = Y.shape
    itemsize = jnp.dtype(Y.dtype).itemsize
    total_bytes = B * n * m * itemsize
    L = B * m

    # One transpose pass each way is kept (not expressible in a BlockSpec); the
    # explicit pad of the previous revision is gone -- Pallas masks ragged tiles.
    y2 = jnp.transpose(Y, (1, 0, 2)).reshape(n, L)

    if lane_tile is None:
        row_bytes = _round_up(n, _SUBLANE) * 4          # f32 compute footprint
        lane_tile = max(_LANE, (block_target // row_bytes) // _LANE * _LANE)
        if L >= 2 * _LANE and total_bytes >= _PARALLEL_SPLIT_BYTES:
            lane_tile = min(lane_tile, _round_up(pl.cdiv(L, 2), _LANE))
    else:
        lane_tile = int(lane_tile)
        if lane_tile % _LANE != 0:
            raise ValueError("lane_tile must be a multiple of 128")
    if lane_tile >= L:
        lane_tile = L        # single full-extent block (always a legal block dim)
    grid = (pl.cdiv(L, lane_tile),)

    out2 = pl.pallas_call(
        _lane_dense_kernel,
        out_shape=jax.ShapeDtypeStruct((n, L), Y.dtype),
        grid_spec=pltpu.PrefetchScalarGridSpec(
            num_scalar_prefetch=0,
            grid=grid,
            in_specs=[pl.BlockSpec((n, lane_tile), lambda j: (0, j))],
            out_specs=pl.BlockSpec((n, lane_tile), lambda j: (0, j)),
        ),
        compiler_params=pltpu.CompilerParams(
            dimension_semantics=("parallel",),
            vmem_limit_bytes=vmem_limit,
        ),
        cost_estimate=pl.CostEstimate(
            flops=int(6 * n * L),
            transcendentals=int(n * L + 2 * L),
            bytes_accessed=int(2 * n * L * itemsize),
        ),
        # y2 is a wrapper-local temporary; let the output reuse its HBM buffer.
        input_output_aliases={0: 0},
    )(y2)

    return out2.reshape(n, B, m).transpose(1, 0, 2)


# ------------------------------- public entry ------------------------------- #

def chained_outcome_transform(Y, Yvar=None, *, use_pallas=None,
                              batch_tile=None, lane_tile=None):
    """forward() of ChainedOutcomeTransform(log=Log(), standardize=Standardize(m)).

    Args:
        Y:    [batch, n, m] array of strictly positive training targets, n >= 2.
        Yvar: must be None (Log() raises NotImplementedError for Yvar in BoTorch).
        use_pallas: None = auto (size-based), True/False = force kernel / fused XLA.
        batch_tile / lane_tile: optional tiling overrides for the two kernel paths.

    Returns:
        (Y_transformed, None)
    """
    if Yvar is not None:
        raise NotImplementedError("Log outcome transform does not support Yvar")
    if Y.ndim != 3:
        raise ValueError("expected Y with shape [batch, n, m]")
    B, n, m = Y.shape
    if n < 2:
        raise ValueError("chained_outcome_transform requires n >= 2 observations")

    itemsize = jnp.dtype(Y.dtype).itemsize
    total_bytes = B * n * m * itemsize
    block_target, vmem_limit = _vmem_budget()

    if use_pallas is None:
        # Small-problem fast path: launch overhead dominates below ~2 MiB.
        use_pallas = total_bytes >= _SMALL_PROBLEM_BYTES

    natural = m >= _NATURAL_LAYOUT_MIN_M
    # Large-n guard: a single minimal block plus double-buffered I/O and ~3 live
    # f32 temporaries (~8x one block) must fit the scoped VMEM limit.
    # TODO(synk): add a tiled-n (two-pass / Welford) kernel instead of falling back.
    min_block_f32 = _round_up(n, _SUBLANE) * (_round_up(m, _LANE) if natural else _LANE) * 4
    if 8 * min_block_f32 > vmem_limit:
        use_pallas = False

    if not use_pallas:
        return _log_standardize(Y, axis=1).astype(Y.dtype), None

    if natural:
        out = _run_natural(Y, block_target, vmem_limit, batch_tile=batch_tile)
    else:
        out = _run_lane_dense(Y, block_target, vmem_limit, lane_tile=lane_tile)
    return out, None


def _reference(Y):
    """Independent pure-JAX reference of the same chain, for verification."""
    log_y = jnp.log(Y.astype(jnp.float32))
    mean = jnp.mean(log_y, axis=-2, keepdims=True)
    std = jnp.std(log_y, axis=-2, keepdims=True, ddof=1)
    std = jnp.where(std >= 1e-8, std, jnp.ones_like(std))
    return (log_y - mean) / std


if __name__ == "__main__":
    key = jax.random.PRNGKey(0)
    k1, k2, k3 = jax.random.split(key, 3)

    # Case 1: small m -> lane-dense kernel; lane_tile=128 forces a multi-tile
    # "parallel" grid with a ragged final tile (exercises the no-explicit-pad path).
    B1, n1, m1 = 40, 16, 4                       # L = B*m = 160 -> tiles 128 + 32
    Y1 = jax.random.uniform(k1, (B1, n1, m1), dtype=jnp.float32,
                            minval=0.1, maxval=5.0)
    out1, yvar1 = chained_outcome_transform(Y1, None, use_pallas=True, lane_tile=128)
    out1 = jax.block_until_ready(out1)
    assert yvar1 is None
    assert out1.shape == (B1, n1, m1)
    assert jnp.allclose(out1, _reference(Y1), atol=2e-5, rtol=2e-5), \
        "mismatch vs reference (lane-dense path)"

    # Case 2: wide m -> natural-layout kernel with zero wrapper repack;
    # batch_tile=1 exercises a multi-step batch grid.
    B2, n2, m2 = 2, 16, 48
    Y2 = jax.random.uniform(k2, (B2, n2, m2), dtype=jnp.float32,
                            minval=0.1, maxval=5.0)
    out2, _ = chained_outcome_transform(Y2, None, use_pallas=True, batch_tile=1)
    out2 = jax.block_until_ready(out2)
    assert jnp.allclose(out2, _reference(Y2), atol=2e-5, rtol=2e-5), \
        "mismatch vs reference (natural-layout path)"

    # Case 3: tiny problem in auto mode -> fused-XLA fast path.
    B3, n3, m3 = 2, 8, 2
    Y3 = jax.random.uniform(k3, (B3, n3, m3), dtype=jnp.float32,
                            minval=0.1, maxval=5.0)
    out3, _ = chained_outcome_transform(Y3, None)
    out3 = jax.block_until_ready(out3)
    assert jnp.allclose(out3, _reference(Y3), atol=2e-5, rtol=2e-5), \
        "mismatch vs reference (fused XLA fast path)"

    print("KERNEL_OK")
</pallas_src>

<mosaic_0001>
module attributes {stable_mosaic.version = 11 : i64} {
  func.func @_lane_dense_kernel(%arg0: i32, %arg1: memref<16x128xf32, #tpu.memory_space<vmem>>, %arg2: memref<16x128xf32, #tpu.memory_space<vmem>>) attributes {dimension_semantics = [#tpu.dimension_semantics<parallel>], iteration_bounds = array<i64: 2>, scalar_prefetch = 0 : i64, scratch_operands = 0 : i64, tpu.core_type = #tpu.core_type<tc>, window_params = [{transform_indices = @transform_0, window_bounds = array<i64: 16, 128>}, {transform_indices = @transform_1, window_bounds = array<i64: 16, 128>}]} {
    %c0 = arith.constant 0 : index
    %c0_0 = arith.constant 0 : index
    %0 = vector.load %arg1[%c0, %c0_0] : memref<16x128xf32, #tpu.memory_space<vmem>>, vector<16x128xf32>
    %1 = math.log %0 : vector<16x128xf32>
    %cst = arith.constant dense<0.000000e+00> : vector<128xf32>
    %2 = vector.multi_reduction <add>, %1, %cst [0] : vector<16x128xf32> to vector<128xf32>
    %3 = vector.shape_cast %2 : vector<128xf32> to vector<1x128xf32>
    %cst_1 = arith.constant 1.600000e+01 : f32
    %4 = vector.broadcast %cst_1 : f32 to vector<1x128xf32>
    %5 = arith.divf %3, %4 : vector<1x128xf32>
    %6 = vector.broadcast %5 : vector<1x128xf32> to vector<16x128xf32>
    %7 = arith.subf %1, %6 : vector<16x128xf32>
    %8 = arith.mulf %7, %7 : vector<16x128xf32>
    %cst_2 = arith.constant dense<0.000000e+00> : vector<128xf32>
    %9 = vector.multi_reduction <add>, %8, %cst_2 [0] : vector<16x128xf32> to vector<128xf32>
    %10 = vector.shape_cast %9 : vector<128xf32> to vector<1x128xf32>
    %cst_3 = arith.constant 0.0666666701 : f32
    %11 = vector.broadcast %cst_3 : f32 to vector<1x128xf32>
    %12 = arith.mulf %10, %11 : vector<1x128xf32>
    %13 = math.sqrt %12 : vector<1x128xf32>
    %cst_4 = arith.constant 9.99999993E-9 : f32
    %14 = vector.broadcast %cst_4 : f32 to vector<1x128xf32>
    %15 = arith.cmpf oge, %13, %14 : vector<1x128xf32>
    %cst_5 = arith.constant 1.000000e+00 : f32
    %16 = vector.broadcast %cst_5 : f32 to vector<1x128xf32>
    %17 = arith.divf %16, %13 : vector<1x128xf32>
    %cst_6 = arith.constant 1.000000e+00 : f32
    %18 = vector.broadcast %cst_6 : f32 to vector<1x128xf32>
    %19 = arith.select %15, %17, %18 : vector<1x128xi1>, vector<1x128xf32>
    %20 = vector.broadcast %19 : vector<1x128xf32> to vector<16x128xf32>
    %21 = arith.mulf %7, %20 : vector<16x128xf32>
    %c0_7 = arith.constant 0 : index
    %c0_8 = arith.constant 0 : index
    %22 = vector.load %arg2[%c0_7, %c0_8] : memref<16x128xf32, #tpu.memory_space<vmem>>, vector<16x128xf32>
    tpu.vector_store %arg2[%c0_7, %c0_8], %21 {strides = array<i32>} : memref<16x128xf32, #tpu.memory_space<vmem>>, vector<16x128xf32>,
    return
  }
  func.func @transform_0(%arg0: i32) -> (i32, i32) {
    %c0_i32 = arith.constant 0 : i32
    %c0_i32_0 = arith.constant 0 : i32
    return %c0_i32, %arg0 : i32, i32
  }
  func.func @transform_1(%arg0: i32) -> (i32, i32) {
    %c0_i32 = arith.constant 0 : i32
    %c0_i32_0 = arith.constant 0 : i32
    return %c0_i32, %arg0 : i32, i32
  }
}

</mosaic_0001>

<llo_original>
// kernel: tpu_custom_call.1
$region0: #{tpu_custom_call.1}
  #allocation0 [shape = 'u32[]', space=smem, size = 0x4, offset = 0x4, fixed_abs, tag = 'smem constant byte address 0x4 - core index']
  #allocation1 [shape = 'u32[144,128]{1,0:T(1,128)}', space=vmem, size = 0x12000, scoped, tag = 'internal scratch']
  %s0 = inlined_call_operand.hbm [shape: f32[16,160], index: 0, kind: input, shape index: {}, may-alias: {0,1}]
  %s1 = inlined_call_operand.hbm [shape: f32[16,160], index: 1, kind: output, shape index: {}, may-alias: {0,1}]
  %s2 = sld [smem:[#allocation0]]
  $region41: #{tpu_custom_call.1} parent=0
    _
  %s4 = ssub.s32 1, %s2
  %s5 = scalar_select 0, %s4, %s2
  $region1: #{tpu_custom_call.1} parent=0
    #allocation2 [shape = 'u8[16384]{0}', space=vmem, size = 0x4000, scoped, tag = 'input window, operand 0']
    #allocation3 [shape = 's32[2]{0}', space=sflag, size = 0x8, scoped, tag = 'scoped memory for tpu_custom_call.1']
    #allocation4 [shape = 's32[2]{0}', space=sflag, size = 0x8, scoped, tag = 'scoped memory for tpu_custom_call.1']
    #allocation5 [shape = 'u8[16384]{0}', space=vmem, size = 0x4000, scoped, tag = 'output window, operand 0']
    %6 = vsyncpa [#allocation3], 0
    %s7 = scalar_lea.sflag [#allocation3], 1
    %8 = vsyncpa %s7, 0
    %9 = vsyncpa [#allocation4], 0
    %s10 = scalar_lea.sflag [#allocation4], 1
    %11 = vsyncpa %s10, 0
    loop: start=0, step=1, limit=4
    $region2: #{tpu_custom_call.1} parent=1 // loop_pre_header
      _
    $region3: #{tpu_custom_call.1} parent=1 // loop_header
      %s13 = sphi 0, %s17
      %p14 = scmp.ge.s32.totalorder %s13, 4
      %s23 = sphi 0, %s25
      %s26 = sphi 0, %s23
      %s27 = sphi 0, %s26
      %s43 = sphi 0, %s27
      %s49 = sphi 0, %s51
      %s52 = sphi 0, %s49
      %s53 = sphi 0, %s52
      %s69 = sphi 0, %s53
    $region4: #{tpu_custom_call.1} parent=1 // loop_header_branch
      %16 = sbr.rel (%p14) target = $region8
    $region5: #{tpu_custom_call.1} parent=1 // loop_body
      %s18 = ssub.s32 %s13, 1
      %s19 = ssub.s32 %s13, 2
      %s20 = sadd.s32 %s13, 1
      %s21 = ssub.s32 %s13, %s20
      %p22 = scmp.eq.s32.totalorder %s21, 0
      %s24 = sadd.s32 %s23, 1
      %s25 = scalar_select %p22, %s23, %s24
      %p28 = pneg %p22
      %p29 = scmp.eq.s32.totalorder %s13, 1
      %p30 = por %p28, %p29
      %p31 = scmp.ne.s32.totalorder %s23, %s26
      %p32 = scmp.eq.s32.totalorder %s13, 0
      %p33 = por %p31, %p32
      %p34 = scmp.ne.s32.totalorder %s23, %s26
      %p35 = scmp.eq.s32.totalorder %s18, 1
      %p36 = por %p34, %p35
      %p37 = scmp.ne.s32.totalorder %s26, %s27
      %p38 = scmp.eq.s32.totalorder %s18, 0
      %p39 = por %p37, %p38
      %p40 = scmp.ne.s32.totalorder %s26, %s27
      %p41 = scmp.eq.s32.totalorder %s19, 1
      %p42 = por %p40, %p41
      %p44 = scmp.ne.s32.totalorder %s27, %s43
      %p45 = scmp.eq.s32.totalorder %s19, 0
      %p46 = por %p44, %p45
      %s47 = ssub.s32 %s13, %s20
      %p48 = scmp.eq.s32.totalorder %s47, 0
      %s50 = sadd.s32 %s49, 1
      %s51 = scalar_select %p48, %s49, %s50
      %p54 = pneg %p48
      %p55 = scmp.eq.s32.totalorder %s13, 1
      %p56 = por %p54, %p55
      %p57 = scmp.ne.s32.totalorder %s49, %s52
      %p58 = scmp.eq.s32.totalorder %s13, 0
      %p59 = por %p57, %p58
      %p60 = scmp.ne.s32.totalorder %s49, %s52
      %p61 = scmp.eq.s32.totalorder %s18, 1
      %p62 = por %p60, %p61
      %p63 = scmp.ne.s32.totalorder %s52, %s53
      %p64 = scmp.eq.s32.totalorder %s18, 0
      %p65 = por %p63, %p64
      %p66 = scmp.ne.s32.totalorder %s52, %s53
      %p67 = scmp.eq.s32.totalorder %s19, 1
      %p68 = por %p66, %p67
      %p70 = scmp.ne.s32.totalorder %s53, %s69
      %p71 = scmp.eq.s32.totalorder %s19, 0
      %p72 = por %p70, %p71
      %p73 = scmp.le.s32.totalorder 1, %s13
      %p74 = scmp.lt.s32.totalorder %s13, 3
      %p75 = pnand %p73, %p74
      %p76 = pneg %p75
      // Predicated region
      $region9: #{tpu_custom_call.1} parent=5 // pred_check
        _
      $region10: #{tpu_custom_call.1} parent=5 // pred_check_branch
        %78 = sbr.rel (%p75) target = $region12
      $region11: #{tpu_custom_call.1} parent=5 // pred_region
        %s79 = ssub.s32 %s13, 1
      $region12: #{tpu_custom_call.1} parent=5 // pred_fallthru
        _
      %p80 = scmp.lt.s32.totalorder %s13, 2
      // Predicated region
      $region13: #{tpu_custom_call.1} parent=5 // pred_check
        %p81 = pneg %p80
      $region14: #{tpu_custom_call.1} parent=5 // pred_check_branch
        %83 = sbr.rel (%p81) target = $region16
      $region15: #{tpu_custom_call.1} parent=5 // pred_region
        // Predicated region
        $region17: #{tpu_custom_call.1} parent=15 // pred_check
          %p84 = pneg %p33
        $region18: #{tpu_custom_call.1} parent=15 // pred_check_branch
          %86 = sbr.rel (%p84) target = $region20
        $region19: #{tpu_custom_call.1} parent=15 // pred_region
          %s87 = sand.u32 %s23, 1
          %s88 = scalar_lea.sflag [#allocation3], %s87
          %s89 = sand.u32 %s23, 1
          %s90 = smul.addr %s89, 16
          %s91 = scalar_lea.vmem [#allocation2], %s90
          %s93 = ssub.s32 256, 256
          %94 = vsyncadd %s88, %s93
          %s95 = smul.addr %s13, 128
          %s96 = scalar_lea.hbm %s0, %s95
          %s97 = sshll.u32 %s91, 4
          %s98 = int_to_ptr.vmem [resolvable:$true] %s97
          %103 = dma.hbm_to_vmem [thread:$0]  %s96, 256, %s98, %s88, 256, 128, 8
        $region20: #{tpu_custom_call.1} parent=15 // pred_fallthru
          _
      $region16: #{tpu_custom_call.1} parent=5 // pred_fallthru
        _
      %p104 = scmp.le.s32.totalorder 1, %s13
      %p105 = scmp.lt.s32.totalorder %s13, 3
      %p106 = pnand %p104, %p105
      %p107 = pneg %p106
      // Predicated region
      $region21: #{tpu_custom_call.1} parent=5 // pred_check
        _
      $region22: #{tpu_custom_call.1} parent=5 // pred_check_branch
        %109 = sbr.rel (%p106) target = $region24
      $region23: #{tpu_custom_call.1} parent=5 // pred_region
        %s110 = ssub.s32 %s13, 1
        %s111 = sand.u32 %s26, 1
        %s112 = scalar_lea.sflag [#allocation3], %s111
        %s113 = sand.u32 %s26, 1
        %s114 = smul.addr %s113, 16
        %s115 = scalar_lea.vmem [#allocation2], %s114
        // Predicated region
        $region25: #{tpu_custom_call.1} parent=23 // pred_check
          %p116 = pneg %p39
        $region26: #{tpu_custom_call.1} parent=23 // pred_check_branch
          %118 = sbr.rel (%p116) target = $region28
        $region27: #{tpu_custom_call.1} parent=23 // pred_region
          %119 = dma.done %s112, 256
        $region28: #{tpu_custom_call.1} parent=23 // pred_fallthru
          _
        %s120 = sand.u32 %s26, 1
        %s121 = scalar_lea.sflag [#allocation3], %s120
        %s122 = sand.u32 %s26, 1
        %s123 = smul.addr %s122, 16
        %s124 = scalar_lea.vmem [#allocation2], %s123
        %p125 = pneg %p39
        %p126 = pneg %p36
        %p127 = pneg %p65
        %p128 = pneg %p62
        %s129 = sand.u32 %s52, 1
        %s130 = scalar_lea.sflag [#allocation4], %s129
        %s131 = sand.u32 %s52, 1
        %s132 = smul.addr %s131, 16
        %s133 = scalar_lea.vmem [#allocation5], %s132
        %v134 = vld [vmem:[%s115] sm:$0xff]
        %v135 = vld [vmem:[%s115 + $0x8] sm:$0xff]
        %v136 = vlog2.pop %v134
        %v137 = vmul.f32 %v136, 0.6931472
        %v138 = vlog2.pop %v135
        %v139 = vmul.f32 %v138, 0.6931472
        %v140 = vadd.f32 %v137, %v139
        %v141 = vrot.slane %v140, 4
        %v142 = vadd.f32 %v140, %v141
        %v143 = vrot.slane %v142, 2
        %v144 = vadd.f32 %v142, %v143
        %v145 = vrot.slane %v144, 1
        %v146 = vadd.f32 %v144, %v145
        %v147 = vrcp.pop 16.0
        %v148 = vmul.f32 %v146, %v147
        %v149 = vsub.f32 %v137, %v148
        %v150 = vsub.f32 %v139, %v148
        %v151 = vmul.f32 %v149, %v149
        %v152 = vmul.f32 %v150, %v150
        %v153 = vadd.f32 %v151, %v152
        %v154 = vrot.slane %v153, 4
        %v155 = vadd.f32 %v153, %v154
        %v156 = vrot.slane %v155, 2
        %v157 = vadd.f32 %v155, %v156
        %v158 = vrot.slane %v157, 1
        %v159 = vadd.f32 %v157, %v158
        %v160 = vmul.f32 %v159, 0.06666667
        %v161 = vrsqrt.pop %v160
        %v162 = vmul.f32 %v160, %v161
        %vm163 = vcmp.eq.f32.partialorder %v160, inf
        %v164 = vsel %vm163, %v160, %v162
        %vm165 = vcmp.eq.f32.partialorder %v160, 0.0
        %v166 = vand.u32 %v160, 2147483648
        %v167 = vsel %vm165, %v166, %v164
        %vm168 = vcmp.ge.f32.partialorder %v167, 1e-08
        %v169 = vrcp.pop %v167
        %v170 = vmul.f32 1.0, %v169
        %v171 = vsel %vm168, %v170, 1.0
        %v172 = vmul.f32 %v149, %v171
        %v173 = vmul.f32 %v150, %v171
        %174 = vst [vmem:[%s133] sm:$0xff] %v172
        %175 = vst [vmem:[%s133 + $0x8] sm:$0xff] %v173
        %s176 = sand.u32 %s52, 1
        %s177 = scalar_lea.sflag [#allocation4], %s176
        %s178 = sand.u32 %s52, 1
        %s179 = smul.addr %s178, 16
        %s180 = scalar_lea.vmem [#allocation5], %s179
        // Predicated region
        $region29: #{tpu_custom_call.1} parent=23 // pred_check
          %p181 = pneg %p62
        $region30: #{tpu_custom_call.1} parent=23 // pred_check_branch
          %183 = sbr.rel (%p181) target = $region32
        $region31: #{tpu_custom_call.1} parent=23 // pred_region
          %s185 = ssub.s32 256, 256
          %186 = vsyncadd %s177, %s185
          %s187 = smul.addr %s18, 128
          %s188 = scalar_lea.hbm %s1, %s187
          %s189 = sshll.u32 %s180, 4
          %s190 = int_to_ptr.vmem [resolvable:$true] %s189
          %195 = dma.vmem_to_hbm [thread:$0]  %s190, 256, %s188, %s177, 128, 256, 8
        $region32: #{tpu_custom_call.1} parent=23 // pred_fallthru
          _
      $region24: #{tpu_custom_call.1} parent=5 // pred_fallthru
        _
      %p196 = scmp.le.s32.totalorder 2, %s13
      // Predicated region
      $region33: #{tpu_custom_call.1} parent=5 // pred_check
        %p197 = pneg %p196
      $region34: #{tpu_custom_call.1} parent=5 // pred_check_branch
        %199 = sbr.rel (%p197) target = $region36
      $region35: #{tpu_custom_call.1} parent=5 // pred_region
        %s200 = ssub.s32 %s13, 2
        // Predicated region
        $region37: #{tpu_custom_call.1} parent=35 // pred_check
          %p201 = pneg %p68
        $region38: #{tpu_custom_call.1} parent=35 // pred_check_branch
          %203 = sbr.rel (%p201) target = $region40
        $region39: #{tpu_custom_call.1} parent=35 // pred_region
          %s204 = sand.u32 %s53, 1
          %s205 = scalar_lea.sflag [#allocation4], %s204
          %s206 = sand.u32 %s53, 1
          %s207 = smul.addr %s206, 16
          %s208 = scalar_lea.vmem [#allocation5], %s207
          %209 = dma.done %s205, 256
        $region40: #{tpu_custom_call.1} parent=35 // pred_fallthru
          _
      $region36: #{tpu_custom_call.1} parent=5 // pred_fallthru
        _
    $region6: #{tpu_custom_call.1} parent=1 // loop_footer
      %s17 = sadd.s32 1, %s13
    $region7: #{tpu_custom_call.1} parent=1 // loop_footer_branch
      %12 = sbr.rel target = $region3
    $region8: #{tpu_custom_call.1} parent=1 // loop_exit
      _
    %210 = vsyncpa [#allocation3], 1
    %s211 = scalar_lea.sflag [#allocation3], 1
    %212 = vsyncpa %s211, 1
    %213 = vsyncpa [#allocation4], 1
    %s214 = scalar_lea.sflag [#allocation4], 1
    %215 = vsyncpa %s214, 1

</llo_original>
